<compile_context>
chip_gen: v6e
topology: v6e:2x2x1
jax: 0.10.0
libtpu: 0.0.40
codegen_flags: <defaults>
</compile_context>

<pallas_src>
import math

import jax
import jax.numpy as jnp
from jax.experimental import pallas as pl
from jax.experimental.pallas import tpu as pltpu


def _mlp_agg_kernel(x_ref, w1_ref, b1_ref, w2_ref, b2_ref, o_ref):
    # hidden = ReLU(x @ W1 + b1)   -- bf16 operands, f32 accumulate
    h = jnp.dot(x_ref[...], w1_ref[...], preferred_element_type=jnp.float32)
    h = jnp.maximum(h + b1_ref[...], 0.0)
    # out = hidden @ W2 + b2       -- feed bf16 into the MXU again, f32 accumulate
    out = jnp.dot(h.astype(w2_ref.dtype), w2_ref[...],
                  preferred_element_type=jnp.float32)
    o_ref[...] = (out + b2_ref[...]).astype(o_ref.dtype)


def mlp_aggregation(x, w1, b1, w2, b2, *, block_batch=128):
    """x: (B, n_clips, F). Returns (B, F) float32."""
    b = x.shape[0]
    feature_size = w2.shape[1]
    x_flat = x.reshape(b, -1)                      # glue: view(b, -1)
    in_dim = x_flat.shape[1]

    # bf16 weights/activations (half HBM bytes, native MXU path); biases stay f32
    # so the bias add / ReLU run on the f32 accumulator.
    x_bf = x_flat.astype(jnp.bfloat16)
    w1_bf = w1.astype(jnp.bfloat16)
    w2_bf = w2.astype(jnp.bfloat16)
    b1_f32 = b1.astype(jnp.float32)
    b2_f32 = b2.astype(jnp.float32)

    # Batch tile: fill the MXU M dimension (128) when the batch is large enough;
    # for small batches the block simply covers the whole (full-dim) batch axis.
    tb = block_batch if b >= block_batch else b
    grid = (pl.cdiv(b, tb),)

    flops = 2 * b * in_dim * feature_size + 2 * b * feature_size * feature_size
    bytes_accessed = (
        x_bf.size * 2 + w1_bf.size * 2 + w2_bf.size * 2
        + b1_f32.size * 4 + b2_f32.size * 4
        + b * feature_size * 4  # f32 output
    )

    vmem = pltpu.MemorySpace.VMEM
    return pl.pallas_call(
        _mlp_agg_kernel,
        out_shape=jax.ShapeDtypeStruct((b, feature_size), jnp.float32),
        grid=grid,
        in_specs=[
            # x tile: advances with the batch grid (double-buffered / pipelined)
            pl.BlockSpec((tb, in_dim), lambda i: (i, 0), memory_space=vmem),
            # weights & biases: constant block index -> stay resident in VMEM
            pl.BlockSpec((in_dim, feature_size), lambda i: (0, 0), memory_space=vmem),
            pl.BlockSpec((1, feature_size), lambda i: (0, 0), memory_space=vmem),
            pl.BlockSpec((feature_size, feature_size), lambda i: (0, 0), memory_space=vmem),
            pl.BlockSpec((1, feature_size), lambda i: (0, 0), memory_space=vmem),
        ],
        out_specs=pl.BlockSpec((tb, feature_size), lambda i: (i, 0), memory_space=vmem),
        compiler_params=pltpu.CompilerParams(
            dimension_semantics=("parallel",),   # batch tiles split across TCs (v7x)
        ),
        cost_estimate=pl.CostEstimate(
            flops=flops, transcendentals=0, bytes_accessed=bytes_accessed),
    )(x_bf, w1_bf, b1_f32, w2_bf, b2_f32)


def init_params(key, feature_size, n_clips):
    """Deterministic init matching PyTorch nn.Linear default (U(-1/sqrt(fan_in), +))."""
    in1 = n_clips * feature_size
    k1, k2, k3, k4 = jax.random.split(key, 4)
    bound1 = 1.0 / math.sqrt(in1)
    bound2 = 1.0 / math.sqrt(feature_size)
    # stored as (in, out) so the kernel does x @ W
    w1 = jax.random.uniform(k1, (in1, feature_size), jnp.float32, -bound1, bound1)
    b1 = jax.random.uniform(k2, (1, feature_size), jnp.float32, -bound1, bound1)
    w2 = jax.random.uniform(k3, (feature_size, feature_size), jnp.float32, -bound2, bound2)
    b2 = jax.random.uniform(k4, (feature_size, feature_size // feature_size * feature_size),
                            jnp.float32, -bound2, bound2)[:1]
    return w1, b1, w2, b2


if __name__ == "__main__":
    feature_size = 128
    n_clips = 4
    batch = 8

    key = jax.random.PRNGKey(0)
    kx, kp = jax.random.split(key)
    x = jax.random.normal(kx, (batch, n_clips, feature_size), jnp.float32)
    w1, b1, w2, b2 = init_params(kp, feature_size, n_clips)

    out = mlp_aggregation(x, w1, b1, w2, b2)
    out = jax.block_until_ready(out)

    # pure-JAX f32 reference; kernel uses bf16 operands -> loosened tolerance
    x_flat = x.reshape(batch, -1)
    ref = jnp.maximum(x_flat @ w1 + b1, 0.0) @ w2 + b2
    assert out.shape == (batch, feature_size)
    assert jnp.allclose(out, ref, atol=2e-2, rtol=2e-2)

    print("KERNEL_OK")
</pallas_src>

<mosaic_0001>
module attributes {stable_mosaic.version = 11 : i64} {
  func.func @_mlp_agg_kernel(%arg0: i32, %arg1: memref<8x512xbf16, #tpu.memory_space<vmem>>, %arg2: memref<512x128xbf16, #tpu.memory_space<vmem>>, %arg3: memref<1x128xf32, #tpu.memory_space<vmem>>, %arg4: memref<128x128xbf16, #tpu.memory_space<vmem>>, %arg5: memref<1x128xf32, #tpu.memory_space<vmem>>, %arg6: memref<8x128xf32, #tpu.memory_space<vmem>>) attributes {dimension_semantics = [#tpu.dimension_semantics<parallel>], iteration_bounds = array<i64: 1>, scalar_prefetch = 0 : i64, scratch_operands = 0 : i64, tpu.core_type = #tpu.core_type<tc>, window_params = [{transform_indices = @transform_0, window_bounds = array<i64: 8, 512>}, {pipeline_mode = #tpu.pipeline_mode<synchronous>, transform_indices = @transform_1, window_bounds = array<i64: 512, 128>}, {pipeline_mode = #tpu.pipeline_mode<synchronous>, transform_indices = @transform_2, window_bounds = array<i64: 1, 128>}, {pipeline_mode = #tpu.pipeline_mode<synchronous>, transform_indices = @transform_3, window_bounds = array<i64: 128, 128>}, {pipeline_mode = #tpu.pipeline_mode<synchronous>, transform_indices = @transform_4, window_bounds = array<i64: 1, 128>}, {transform_indices = @transform_5, window_bounds = array<i64: 8, 128>}]} {
    %c0 = arith.constant 0 : index
    %c0_0 = arith.constant 0 : index
    %0 = vector.load %arg1[%c0, %c0_0] : memref<8x512xbf16, #tpu.memory_space<vmem>>, vector<8x512xbf16>
    %c0_1 = arith.constant 0 : index
    %c0_2 = arith.constant 0 : index
    %1 = vector.load %arg2[%c0_1, %c0_2] : memref<512x128xbf16, #tpu.memory_space<vmem>>, vector<512x128xbf16>
    %cst = arith.constant dense<0.000000e+00> : vector<8x128xf32>
    %2 = tpu.matmul %0, %1, %cst {dimension_numbers = #tpu.dot_dimension_numbers<[1], [0], [0], [1], [0, 0, 1, 1], [], []>} : vector<8x512xbf16>, vector<512x128xbf16>, vector<8x128xf32> -> vector<8x128xf32>
    %c0_3 = arith.constant 0 : index
    %c0_4 = arith.constant 0 : index
    %3 = vector.load %arg3[%c0_3, %c0_4] : memref<1x128xf32, #tpu.memory_space<vmem>>, vector<1x128xf32>
    %4 = vector.broadcast %3 : vector<1x128xf32> to vector<8x128xf32>
    %5 = arith.addf %2, %4 : vector<8x128xf32>
    %cst_5 = arith.constant 0.000000e+00 : f32
    %6 = vector.broadcast %cst_5 : f32 to vector<8x128xf32>
    %7 = arith.maximumf %5, %6 : vector<8x128xf32>
    %8 = arith.truncf %7 : vector<8x128xf32> to vector<8x128xbf16>
    %c0_6 = arith.constant 0 : index
    %c0_7 = arith.constant 0 : index
    %9 = vector.load %arg4[%c0_6, %c0_7] : memref<128x128xbf16, #tpu.memory_space<vmem>>, vector<128x128xbf16>
    %cst_8 = arith.constant dense<0.000000e+00> : vector<8x128xf32>
    %10 = tpu.matmul %8, %9, %cst_8 {dimension_numbers = #tpu.dot_dimension_numbers<[1], [0], [0], [1], [0, 0, 1, 1], [], []>} : vector<8x128xbf16>, vector<128x128xbf16>, vector<8x128xf32> -> vector<8x128xf32>
    %c0_9 = arith.constant 0 : index
    %c0_10 = arith.constant 0 : index
    %11 = vector.load %arg5[%c0_9, %c0_10] : memref<1x128xf32, #tpu.memory_space<vmem>>, vector<1x128xf32>
    %12 = vector.broadcast %11 : vector<1x128xf32> to vector<8x128xf32>
    %13 = arith.addf %10, %12 : vector<8x128xf32>
    %c0_11 = arith.constant 0 : index
    %c0_12 = arith.constant 0 : index
    %14 = vector.load %arg6[%c0_11, %c0_12] : memref<8x128xf32, #tpu.memory_space<vmem>>, vector<8x128xf32>
    tpu.vector_store %arg6[%c0_11, %c0_12], %13 {strides = array<i32>} : memref<8x128xf32, #tpu.memory_space<vmem>>, vector<8x128xf32>,
    return
  }
  func.func @transform_0(%arg0: i32) -> (i32, i32) {
    %c0_i32 = arith.constant 0 : i32
    %c0_i32_0 = arith.constant 0 : i32
    return %arg0, %c0_i32 : i32, i32
  }
  func.func @transform_1(%arg0: i32) -> (i32, i32) {
    %c0_i32 = arith.constant 0 : i32
    %c0_i32_0 = arith.constant 0 : i32
    %c0_i32_1 = arith.constant 0 : i32
    return %c0_i32, %c0_i32_0 : i32, i32
  }
  func.func @transform_2(%arg0: i32) -> (i32, i32) {
    %c0_i32 = arith.constant 0 : i32
    %c0_i32_0 = arith.constant 0 : i32
    %c0_i32_1 = arith.constant 0 : i32
    return %c0_i32, %c0_i32_0 : i32, i32
  }
  func.func @transform_3(%arg0: i32) -> (i32, i32) {
    %c0_i32 = arith.constant 0 : i32
    %c0_i32_0 = arith.constant 0 : i32
    %c0_i32_1 = arith.constant 0 : i32
    return %c0_i32, %c0_i32_0 : i32, i32
  }
  func.func @transform_4(%arg0: i32) -> (i32, i32) {
    %c0_i32 = arith.constant 0 : i32
    %c0_i32_0 = arith.constant 0 : i32
    %c0_i32_1 = arith.constant 0 : i32
    return %c0_i32, %c0_i32_0 : i32, i32
  }
  func.func @transform_5(%arg0: i32) -> (i32, i32) {
    %c0_i32 = arith.constant 0 : i32
    %c0_i32_0 = arith.constant 0 : i32
    return %arg0, %c0_i32 : i32, i32
  }
}

</mosaic_0001>

<llo_original>
// kernel: tpu_custom_call.1
$region0: #{tpu_custom_call.1}
  #allocation0 [shape = 'u32[]', space=smem, size = 0x4, offset = 0x4, fixed_abs, tag = 'smem constant byte address 0x4 - core index']
  #allocation1 [shape = 'u32[144,128]{1,0:T(1,128)}', space=vmem, size = 0x12000, scoped, tag = 'internal scratch']
  %s0 = inlined_call_operand.hbm [shape: bf16[8,512], index: 0, kind: input, shape index: {}]
  %s1 = inlined_call_operand.hbm [shape: bf16[512,128], index: 1, kind: input, shape index: {}]
  %s2 = inlined_call_operand.vmem [shape: f32[1,128], index: 2, kind: input, shape index: {}]
  %s3 = inlined_call_operand.hbm [shape: bf16[128,128], index: 3, kind: input, shape index: {}]
  %s4 = inlined_call_operand.vmem [shape: f32[1,128], index: 4, kind: input, shape index: {}]
  %s5 = inlined_call_operand.hbm [shape: f32[8,128], index: 5, kind: output, shape index: {}]
  %s6 = sld [smem:[#allocation0]]
  $region42: #{tpu_custom_call.1} parent=0
    _
  %s8 = ssub.s32 1, %s6
  %s9 = scalar_select 0, %s8, %s6
  $region1: #{tpu_custom_call.1} parent=0
    #allocation2 [shape = 'u8[8192]{0}', space=vmem, size = 0x2000, scoped, tag = 'input window, operand 0, single buffered']
    #allocation3 [shape = 's32[1]{0}', space=sflag, size = 0x4, scoped, tag = 'scoped memory for tpu_custom_call.1']
    #allocation4 [shape = 's32[1]{0}', space=sflag, size = 0x4, scoped, tag = 'scoped memory for tpu_custom_call.1']
    #allocation5 [shape = 'u8[131072]{0}', space=vmem, size = 0x20000, scoped, tag = 'input window, operand 1, single buffered']
    #allocation6 [shape = 's32[1]{0}', space=sflag, size = 0x4, scoped, tag = 'scoped memory for tpu_custom_call.1']
    #allocation7 [shape = 'u8[32768]{0}', space=vmem, size = 0x8000, scoped, tag = 'input window, operand 3, single buffered']
    #allocation8 [shape = 'u8[4096]{0}', space=vmem, size = 0x1000, scoped, tag = 'output window, operand 0, single buffered']
    %10 = vsyncpa [#allocation3], 0
    %11 = vsyncpa [#allocation6], 0
    %12 = vsyncpa [#allocation4], 0
    // Predicated region
    $region2: #{tpu_custom_call.1} parent=1 // pred_check
      _
    $region3: #{tpu_custom_call.1} parent=1 // pred_check_branch
      %14 = sbr.rel (0) target = $region5
    $region4: #{tpu_custom_call.1} parent=1 // pred_region
      %s16 = ssub.s32 256, 256
      %17 = vsyncadd [#allocation3], %s16
      %s19 = sshll.u32 [#allocation2], 4
      %s20 = int_to_ptr.vmem [resolvable:$true] %s19
      %22 = dma.hbm_to_vmem [thread:$0]  %s0, 256, %s20, [#allocation3]
    $region5: #{tpu_custom_call.1} parent=1 // pred_fallthru
      _
    // Predicated region
    $region6: #{tpu_custom_call.1} parent=1 // pred_check
      _
    $region7: #{tpu_custom_call.1} parent=1 // pred_check_branch
      %24 = sbr.rel (0) target = $region9
    $region8: #{tpu_custom_call.1} parent=1 // pred_region
      %s26 = ssub.s32 4096, 4096
      %27 = vsyncadd [#allocation6], %s26
      %s28 = sshll.u32 [#allocation5], 4
      %s29 = int_to_ptr.vmem [resolvable:$true] %s28
      %34 = dma.hbm_to_vmem [thread:$0]  %s1, 4096, %s29, [#allocation6], 64, 64, 4
    $region9: #{tpu_custom_call.1} parent=1 // pred_fallthru
      _
    // Predicated region
    $region10: #{tpu_custom_call.1} parent=1 // pred_check
      _
    $region11: #{tpu_custom_call.1} parent=1 // pred_check_branch
      %36 = sbr.rel (0) target = $region13
    $region12: #{tpu_custom_call.1} parent=1 // pred_region
      _
    $region13: #{tpu_custom_call.1} parent=1 // pred_fallthru
      _
    // Predicated region
    $region14: #{tpu_custom_call.1} parent=1 // pred_check
      _
    $region15: #{tpu_custom_call.1} parent=1 // pred_check_branch
      %38 = sbr.rel (0) target = $region17
    $region16: #{tpu_custom_call.1} parent=1 // pred_region
      %s40 = ssub.s32 1024, 1024
      %41 = vsyncadd [#allocation6], %s40
      %s42 = sshll.u32 [#allocation7], 4
      %s43 = int_to_ptr.vmem [resolvable:$true] %s42
      %48 = dma.hbm_to_vmem [thread:$0]  %s3, 1024, %s43, [#allocation6], 64, 64, 4
    $region17: #{tpu_custom_call.1} parent=1 // pred_fallthru
      _
    // Predicated region
    $region18: #{tpu_custom_call.1} parent=1 // pred_check
      _
    $region19: #{tpu_custom_call.1} parent=1 // pred_check_branch
      %50 = sbr.rel (0) target = $region21
    $region20: #{tpu_custom_call.1} parent=1 // pred_region
      _
    $region21: #{tpu_custom_call.1} parent=1 // pred_fallthru
      _
    // Predicated region
    $region22: #{tpu_custom_call.1} parent=1 // pred_check
      _
    $region23: #{tpu_custom_call.1} parent=1 // pred_check_branch
      %52 = sbr.rel (0) target = $region25
    $region24: #{tpu_custom_call.1} parent=1 // pred_region
      %53 = dma.done [#allocation3], 256
    $region25: #{tpu_custom_call.1} parent=1 // pred_fallthru
      _
    // Predicated region
    $region26: #{tpu_custom_call.1} parent=1 // pred_check
      _
    $region27: #{tpu_custom_call.1} parent=1 // pred_check_branch
      %55 = sbr.rel (0) target = $region29
    $region28: #{tpu_custom_call.1} parent=1 // pred_region
      %56 = dma.done [#allocation6], 4096
    $region29: #{tpu_custom_call.1} parent=1 // pred_fallthru
      _
    // Predicated region
    $region30: #{tpu_custom_call.1} parent=1 // pred_check
      _
    $region31: #{tpu_custom_call.1} parent=1 // pred_check_branch
      %58 = sbr.rel (0) target = $region33
    $region32: #{tpu_custom_call.1} parent=1 // pred_region
      %59 = dma.done [#allocation6], 1024
    $region33: #{tpu_custom_call.1} parent=1 // pred_fallthru
      _
    %v61 = vld [vmem:[#allocation2] sm:$0xff]
    %v62 = vld [vmem:[#allocation2 + $0x8] sm:$0xff]
    %v63 = vld [vmem:[#allocation5] sm:$0xf]
    %v64 = vld [vmem:[#allocation5 + $0x4] sm:$0xf]
    %v65 = vld [vmem:[#allocation5 + $0x8] sm:$0xf]
    %v66 = vld [vmem:[#allocation5 + $0xc] sm:$0xf]
    %v67 = vld [vmem:[#allocation5 + $0x10] sm:$0xf]
    %v68 = vld [vmem:[#allocation5 + $0x14] sm:$0xf]
    %v69 = vld [vmem:[#allocation5 + $0x18] sm:$0xf]
    %v70 = vld [vmem:[#allocation5 + $0x1c] sm:$0xf]
    %v71 = vld [vmem:[#allocation5 + $0x20] sm:$0xf]
    %v72 = vld [vmem:[#allocation5 + $0x24] sm:$0xf]
    %v73 = vld [vmem:[#allocation5 + $0x28] sm:$0xf]
    %v74 = vld [vmem:[#allocation5 + $0x2c] sm:$0xf]
    %v75 = vld [vmem:[#allocation5 + $0x30] sm:$0xf]
    %v76 = vld [vmem:[#allocation5 + $0x34] sm:$0xf]
    %v77 = vld [vmem:[#allocation5 + $0x38] sm:$0xf]
    %v78 = vld [vmem:[#allocation5 + $0x3c] sm:$0xf]
    %v79 = vld [vmem:[#allocation5 + $0x40] sm:$0xf]
    %v80 = vld [vmem:[#allocation5 + $0x44] sm:$0xf]
    %v81 = vld [vmem:[#allocation5 + $0x48] sm:$0xf]
    %v82 = vld [vmem:[#allocation5 + $0x4c] sm:$0xf]
    %v83 = vld [vmem:[#allocation5 + $0x50] sm:$0xf]
    %v84 = vld [vmem:[#allocation5 + $0x54] sm:$0xf]
    %v85 = vld [vmem:[#allocation5 + $0x58] sm:$0xf]
    %v86 = vld [vmem:[#allocation5 + $0x5c] sm:$0xf]
    %v87 = vld [vmem:[#allocation5 + $0x60] sm:$0xf]
    %v88 = vld [vmem:[#allocation5 + $0x64] sm:$0xf]
    %v89 = vld [vmem:[#allocation5 + $0x68] sm:$0xf]
    %v90 = vld [vmem:[#allocation5 + $0x6c] sm:$0xf]
    %v91 = vld [vmem:[#allocation5 + $0x70] sm:$0xf]
    %v92 = vld [vmem:[#allocation5 + $0x74] sm:$0xf]
    %v93 = vld [vmem:[#allocation5 + $0x78] sm:$0xf]
    %v94 = vld [vmem:[#allocation5 + $0x7c] sm:$0xf]
    %v95 = vld [vmem:[#allocation5 + $0x80] sm:$0xf]
    %v96 = vld [vmem:[#allocation5 + $0x84] sm:$0xf]
    %v97 = vld [vmem:[#allocation5 + $0x88] sm:$0xf]
    %v98 = vld [vmem:[#allocation5 + $0x8c] sm:$0xf]
    %v99 = vld [vmem:[#allocation5 + $0x90] sm:$0xf]
    %v100 = vld [vmem:[#allocation5 + $0x94] sm:$0xf]
    %v101 = vld [vmem:[#allocation5 + $0x98] sm:$0xf]
    %v102 = vld [vmem:[#allocation5 + $0x9c] sm:$0xf]
    %v103 = vld [vmem:[#allocation5 + $0xa0] sm:$0xf]
    %v104 = vld [vmem:[#allocation5 + $0xa4] sm:$0xf]
    %v105 = vld [vmem:[#allocation5 + $0xa8] sm:$0xf]
    %v106 = vld [vmem:[#allocation5 + $0xac] sm:$0xf]
    %v107 = vld [vmem:[#allocation5 + $0xb0] sm:$0xf]
    %v108 = vld [vmem:[#allocation5 + $0xb4] sm:$0xf]
    %v109 = vld [vmem:[#allocation5 + $0xb8] sm:$0xf]
    %v110 = vld [vmem:[#allocation5 + $0xbc] sm:$0xf]
    %v111 = vld [vmem:[#allocation5 + $0xc0] sm:$0xf]
    %v112 = vld [vmem:[#allocation5 + $0xc4] sm:$0xf]
    %v113 = vld [vmem:[#allocation5 + $0xc8] sm:$0xf]
    %v114 = vld [vmem:[#allocation5 + $0xcc] sm:$0xf]
    %v115 = vld [vmem:[#allocation5 + $0xd0] sm:$0xf]
    %v116 = vld [vmem:[#allocation5 + $0xd4] sm:$0xf]
    %v117 = vld [vmem:[#allocation5 + $0xd8] sm:$0xf]
    %v118 = vld [vmem:[#allocation5 + $0xdc] sm:$0xf]
    %v119 = vld [vmem:[#allocation5 + $0xe0] sm:$0xf]
    %v120 = vld [vmem:[#allocation5 + $0xe4] sm:$0xf]
    %v121 = vld [vmem:[#allocation5 + $0xe8] sm:$0xf]
    %v122 = vld [vmem:[#allocation5 + $0xec] sm:$0xf]
    %v123 = vld [vmem:[#allocation5 + $0xf0] sm:$0xf]
    %v124 = vld [vmem:[#allocation5 + $0xf4] sm:$0xf]
    %v125 = vld [vmem:[#allocation5 + $0xf8] sm:$0xf]
    %v126 = vld [vmem:[#allocation5 + $0xfc] sm:$0xf]
    %v127 = vld [vmem:[%s2] sm:$0x1]
    %v129 = vlaneseq
    %v130 = vshrl.u32 %v129, 7
    %v131 = vsub.s32 0, %v130
    %v132 = vrot.slane %v127, %v131
    %v136 = vunpack.c.l.b16 %v61
    %v137 = vunpack.c.h.b16 %v61
    %v138 = vunpack.c.l.b16 %v62
    %v139 = vunpack.c.h.b16 %v62
    %v140 = vpack.c.b16 %v136, %v136
    %v141 = vpack.c.b16 %v137, %v137
    %v142 = vpack.c.b16 %v138, %v138
    %v143 = vpack.c.b16 %v139, %v139
    %v212 = vunpack.c.l.b16 %v63
    %v213 = vunpack.c.l.b16 %v64
    %v214 = vunpack.c.l.b16 %v65
    %v215 = vunpack.c.l.b16 %v66
    %v216 = vunpack.c.l.b16 %v67
    %v217 = vunpack.c.l.b16 %v68
    %v218 = vunpack.c.l.b16 %v69
    %v219 = vunpack.c.l.b16 %v70
    %v220 = vunpack.c.l.b16 %v71
    %v221 = vunpack.c.l.b16 %v72
    %v222 = vunpack.c.l.b16 %v73
    %v223 = vunpack.c.l.b16 %v74
    %v224 = vunpack.c.l.b16 %v75
    %v225 = vunpack.c.l.b16 %v76
    %v226 = vunpack.c.l.b16 %v77
    %v227 = vunpack.c.l.b16 %v78
    %v228 = vunpack.c.l.b16 %v79
    %v229 = vunpack.c.l.b16 %v80
    %v230 = vunpack.c.l.b16 %v81
    %v231 = vunpack.c.l.b16 %v82
    %v232 = vunpack.c.l.b16 %v83
    %v233 = vunpack.c.l.b16 %v84
    %v234 = vunpack.c.l.b16 %v85
    %v235 = vunpack.c.l.b16 %v86
    %v236 = vunpack.c.l.b16 %v87
    %v237 = vunpack.c.l.b16 %v88
    %v238 = vunpack.c.l.b16 %v89
    %v239 = vunpack.c.l.b16 %v90
    %v240 = vunpack.c.l.b16 %v91
    %v241 = vunpack.c.l.b16 %v92
    %v242 = vunpack.c.l.b16 %v93
    %v243 = vunpack.c.l.b16 %v94
    %v244 = vunpack.c.l.b16 %v95
    %v245 = vunpack.c.l.b16 %v96
    %v246 = vunpack.c.l.b16 %v97
    %v247 = vunpack.c.l.b16 %v98
    %v248 = vunpack.c.l.b16 %v99
    %v249 = vunpack.c.l.b16 %v100
    %v250 = vunpack.c.l.b16 %v101
    %v251 = vunpack.c.l.b16 %v102
    %v252 = vunpack.c.l.b16 %v103
    %v253 = vunpack.c.l.b16 %v104
    %v254 = vunpack.c.l.b16 %v105
    %v255 = vunpack.c.l.b16 %v106
    %v256 = vunpack.c.l.b16 %v107
    %v257 = vunpack.c.l.b16 %v108
    %v258 = vunpack.c.l.b16 %v109
    %v259 = vunpack.c.l.b16 %v110
    %v260 = vunpack.c.l.b16 %v111
    %v261 = vunpack.c.l.b16 %v112
    %v262 = vunpack.c.l.b16 %v113
    %v263 = vunpack.c.l.b16 %v114
    %v264 = vunpack.c.l.b16 %v115
    %v265 = vunpack.c.l.b16 %v116
    %v266 = vunpack.c.l.b16 %v117
    %v267 = vunpack.c.l.b16 %v118
    %v268 = vunpack.c.l.b16 %v119
    %v269 = vunpack.c.l.b16 %v120
    %v270 = vunpack.c.l.b16 %v121
    %v271 = vunpack.c.l.b16 %v122
    %v272 = vunpack.c.l.b16 %v123
    %v273 = vunpack.c.l.b16 %v124
    %v274 = vunpack.c.l.b16 %v125
    %v275 = vunpack.c.l.b16 %v126
    %v276 = vpack.c.b16 %v213, %v212
    %v277 = vpack.c.b16 %v215, %v214
    %v278 = vpack.c.b16 %v217, %v216
    %v279 = vpack.c.b16 %v219, %v218
    %v280 = vpack.c.b16 %v221, %v220
    %v281 = vpack.c.b16 %v223, %v222
    %v282 = vpack.c.b16 %v225, %v224
    %v283 = vpack.c.b16 %v227, %v226
    %v284 = vpack.c.b16 %v229, %v228
    %v285 = vpack.c.b16 %v231, %v230
    %v286 = vpack.c.b16 %v233, %v232
    %v287 = vpack.c.b16 %v235, %v234
    %v288 = vpack.c.b16 %v237, %v236
    %v289 = vpack.c.b16 %v239, %v238
    %v290 = vpack.c.b16 %v241, %v240
    %v291 = vpack.c.b16 %v243, %v242
    %v292 = vpack.c.b16 %v245, %v244
    %v293 = vpack.c.b16 %v247, %v246
    %v294 = vpack.c.b16 %v249, %v248
    %v295 = vpack.c.b16 %v251, %v250
    %v296 = vpack.c.b16 %v253, %v252
    %v297 = vpack.c.b16 %v255, %v254
    %v298 = vpack.c.b16 %v257, %v256
    %v299 = vpack.c.b16 %v259, %v258
    %v300 = vpack.c.b16 %v261, %v260
    %v301 = vpack.c.b16 %v263, %v262
    %v302 = vpack.c.b16 %v265, %v264
    %v303 = vpack.c.b16 %v267, %v266
    %v304 = vpack.c.b16 %v269, %v268
    %v305 = vpack.c.b16 %v271, %v270
    %v306 = vpack.c.b16 %v273, %v272
    %v307 = vpack.c.b16 %v275, %v274
    %340 = vmatprep.subr.bf16.mxu0 0
    %341 = vmatpush1.bf16.msra.mxu0 %v283
    %342 = vmatprep.subr.bf16.mxu0 0
    %343 = vmatpush1.bf16.msra.mxu0 %v282
    %344 = vmatprep.subr.bf16.mxu0 0
    %345 = vmatpush1.bf16.msra.mxu0 %v281
    %346 = vmatprep.subr.bf16.mxu0 0
    %347 = vmatpush1.bf16.msra.mxu0 %v280
    %348 = vmatprep.subr.bf16.mxu0 0
    %349 = vmatpush1.bf16.msra.mxu0 %v279
    %350 = vmatprep.subr.bf16.mxu0 0
    %351 = vmatpush1.bf16.msra.mxu0 %v278
    %352 = vmatprep.subr.bf16.mxu0 0
    %353 = vmatpush1.bf16.msra.mxu0 %v277
    %354 = vmatprep.subr.bf16.mxu0 0
    %355 = vmatpush1.bf16.msra.mxu0 %v276
    %356 = vmatprep.subr.bf16.mxu0 0
    %357 = vmatpush2.bf16.msra.mxu0 %v291
    %358 = vmatprep.subr.bf16.mxu0 0
    %359 = vmatpush2.bf16.msra.mxu0 %v290
    %360 = vmatprep.subr.bf16.mxu0 0
    %361 = vmatpush2.bf16.msra.mxu0 %v289
    %362 = vmatprep.subr.bf16.mxu0 0
    %363 = vmatpush2.bf16.msra.mxu0 %v288
    %364 = vmatprep.subr.bf16.mxu0 0
    %365 = vmatpush2.bf16.msra.mxu0 %v287
    %366 = vmatprep.subr.bf16.mxu0 0
    %367 = vmatpush2.bf16.msra.mxu0 %v286
    %368 = vmatprep.subr.bf16.mxu0 0
    %369 = vmatpush2.bf16.msra.mxu0 %v285
    %370 = vmatprep.subr.bf16.mxu0 0
    %371 = vmatpush2.bf16.msra.mxu0 %v284
    %372 = vmatprep.mubr.bf16.mxu0 %v141
    %373 = vmatmul.mubr.bf16.gmra.mxu0 %v140
    %v374 = vpop.f32.mrf.mxu0
    %v375 = vadd.f32 %v132, %v374
    %v376 = vpop.f32.mrf.mxu0
    %v377 = vpop.f32.mrf.mxu0
    %v378 = vpop.f32.mrf.mxu0
    %379 = vdwg.mxu0
    %380 = vmatprep.subr.bf16.mxu0 0
    %381 = vmatpush1.bf16.msra.mxu0 %v299
    %382 = vmatprep.subr.bf16.mxu0 0
    %383 = vmatpush1.bf16.msra.mxu0 %v298
    %384 = vmatprep.subr.bf16.mxu0 0
    %385 = vmatpush1.bf16.msra.mxu0 %v297
    %386 = vmatprep.subr.bf16.mxu0 0
    %387 = vmatpush1.bf16.msra.mxu0 %v296
    %388 = vmatprep.subr.bf16.mxu0 0
    %389 = vmatpush1.bf16.msra.mxu0 %v295
    %390 = vmatprep.subr.bf16.mxu0 0
    %391 = vmatpush1.bf16.msra.mxu0 %v294
    %392 = vmatprep.subr.bf16.mxu0 0
    %393 = vmatpush1.bf16.msra.mxu0 %v293
    %394 = vmatprep.subr.bf16.mxu0 0
    %395 = vmatpush1.bf16.msra.mxu0 %v292
    %396 = vmatprep.subr.bf16.mxu0 0
    %397 = vmatpush2.bf16.msra.mxu0 %v307
    %398 = vmatprep.subr.bf16.mxu0 0
    %399 = vmatpush2.bf16.msra.mxu0 %v306
    %400 = vmatprep.subr.bf16.mxu0 0
    %401 = vmatpush2.bf16.msra.mxu0 %v305
    %402 = vmatprep.subr.bf16.mxu0 0
    %403 = vmatpush2.bf16.msra.mxu0 %v304
    %404 = vmatprep.subr.bf16.mxu0 0
    %405 = vmatpush2.bf16.msra.mxu0 %v303
    %406 = vmatprep.subr.bf16.mxu0 0
    %407 = vmatpush2.bf16.msra.mxu0 %v302
    %408 = vmatprep.subr.bf16.mxu0 0
    %409 = vmatpush2.bf16.msra.mxu0 %v301
    %410 = vmatprep.subr.bf16.mxu0 0
    %411 = vmatpush2.bf16.msra.mxu0 %v300
    %412 = vmatprep.mubr.bf16.mxu0 %v143
    %413 = vmatmul.mubr.bf16.gmra.mxu0 %v142
    %v414 = vpop.f32.mrf.mxu0
    %v415 = vadd.f32 %v375, %v414
    %v416 = vpop.f32.mrf.mxu0
    %v417 = vpop.f32.mrf.mxu0
    %v418 = vpop.f32.mrf.mxu0
    %419 = vdwg.mxu0
    %v420 = vmax.f32 %v415, 0.0
    %v421 = vpack.c.bf16 %v420, %v420
    %v422 = vld [vmem:[#allocation7] sm:$0xf]
    %v423 = vld [vmem:[#allocation7 + $0x4] sm:$0xf]
    %v424 = vld [vmem:[#allocation7 + $0x8] sm:$0xf]
    %v425 = vld [vmem:[#allocation7 + $0xc] sm:$0xf]
    %v426 = vld [vmem:[#allocation7 + $0x10] sm:$0xf]
    %v427 = vld [vmem:[#allocation7 + $0x14] sm:$0xf]
    %v428 = vld [vmem:[#allocation7 + $0x18] sm:$0xf]
    %v429 = vld [vmem:[#allocation7 + $0x1c] sm:$0xf]
    %v430 = vld [vmem:[#allocation7 + $0x20] sm:$0xf]
    %v431 = vld [vmem:[#allocation7 + $0x24] sm:$0xf]
    %v432 = vld [vmem:[#allocation7 + $0x28] sm:$0xf]
    %v433 = vld [vmem:[#allocation7 + $0x2c] sm:$0xf]
    %v434 = vld [vmem:[#allocation7 + $0x30] sm:$0xf]
    %v435 = vld [vmem:[#allocation7 + $0x34] sm:$0xf]
    %v436 = vld [vmem:[#allocation7 + $0x38] sm:$0xf]
    %v437 = vld [vmem:[#allocation7 + $0x3c] sm:$0xf]
    %v438 = vld [vmem:[%s4] sm:$0x1]
    %v440 = vlaneseq
    %v441 = vshrl.u32 %v440, 7
    %v442 = vsub.s32 0, %v441
    %v443 = vrot.slane %v438, %v442
    %v461 = vunpack.c.l.b16 %v422
    %v462 = vunpack.c.l.b16 %v423
    %v463 = vunpack.c.l.b16 %v424
    %v464 = vunpack.c.l.b16 %v425
    %v465 = vunpack.c.l.b16 %v426
    %v466 = vunpack.c.l.b16 %v427
    %v467 = vunpack.c.l.b16 %v428
    %v468 = vunpack.c.l.b16 %v429
    %v469 = vunpack.c.l.b16 %v430
    %v470 = vunpack.c.l.b16 %v431
    %v471 = vunpack.c.l.b16 %v432
    %v472 = vunpack.c.l.b16 %v433
    %v473 = vunpack.c.l.b16 %v434
    %v474 = vunpack.c.l.b16 %v435
    %v475 = vunpack.c.l.b16 %v436
    %v476 = vunpack.c.l.b16 %v437
    %v477 = vpack.c.b16 %v462, %v461
    %v478 = vpack.c.b16 %v464, %v463
    %v479 = vpack.c.b16 %v466, %v465
    %v480 = vpack.c.b16 %v468, %v467
    %v481 = vpack.c.b16 %v470, %v469
    %v482 = vpack.c.b16 %v472, %v471
    %v483 = vpack.c.b16 %v474, %v473
    %v484 = vpack.c.b16 %v476, %v475
    %493 = vmatprep.subr.bf16.mxu0 0
    %494 = vmatpush1.bf16.msra.mxu0 %v484
    %495 = vmatprep.subr.bf16.mxu0 0
    %496 = vmatpush1.bf16.msra.mxu0 %v483
    %497 = vmatprep.subr.bf16.mxu0 0
    %498 = vmatpush1.bf16.msra.mxu0 %v482
    %499 = vmatprep.subr.bf16.mxu0 0
    %500 = vmatpush1.bf16.msra.mxu0 %v481
    %501 = vmatprep.subr.bf16.mxu0 0
    %502 = vmatpush1.bf16.msra.mxu0 %v480
    %503 = vmatprep.subr.bf16.mxu0 0
    %504 = vmatpush1.bf16.msra.mxu0 %v479
    %505 = vmatprep.subr.bf16.mxu0 0
    %506 = vmatpush1.bf16.msra.mxu0 %v478
    %507 = vmatprep.subr.bf16.mxu0 0
    %508 = vmatpush1.bf16.msra.mxu0 %v477
    %509 = vmatprep.subr.bf16.mxu0 0
    %510 = vmatpush2.bf16.msra.mxu0 0
    %511 = vmatprep.subr.bf16.mxu0 0
    %512 = vmatpush2.bf16.msra.mxu0 0
    %513 = vmatprep.subr.bf16.mxu0 0
    %514 = vmatpush2.bf16.msra.mxu0 0
    %515 = vmatprep.subr.bf16.mxu0 0
    %516 = vmatpush2.bf16.msra.mxu0 0
    %517 = vmatprep.subr.bf16.mxu0 0
    %518 = vmatpush2.bf16.msra.mxu0 0
    %519 = vmatprep.subr.bf16.mxu0 0
    %520 = vmatpush2.bf16.msra.mxu0 0
    %521 = vmatprep.subr.bf16.mxu0 0
    %522 = vmatpush2.bf16.msra.mxu0 0
    %523 = vmatprep.subr.bf16.mxu0 0
    %524 = vmatpush2.bf16.msra.mxu0 0
    %525 = vmatprep.mubr.bf16.mxu0 0
    %526 = vmatmul.mubr.bf16.gmra.mxu0 %v421
    %v527 = vpop.f32.mrf.mxu0
    %v528 = vadd.f32 %v443, %v527
    %v529 = vpop.f32.mrf.mxu0
    %v530 = vpop.f32.mrf.mxu0
    %v531 = vpop.f32.mrf.mxu0
    %532 = vdwg.mxu0
    %533 = vst [vmem:[#allocation8] sm:$0xff] %v528
    // Predicated region
    $region34: #{tpu_custom_call.1} parent=1 // pred_check
      _
    $region35: #{tpu_custom_call.1} parent=1 // pred_check_branch
      %535 = sbr.rel (0) target = $region37
    $region36: #{tpu_custom_call.1} parent=1 // pred_region
      %s537 = ssub.s32 128, 128
      %538 = vsyncadd [#allocation4], %s537
      %s540 = sshll.u32 [#allocation8], 4
      %s541 = int_to_ptr.vmem [resolvable:$true] %s540
      %543 = dma.vmem_to_hbm [thread:$0]  %s541, 128, %s5, [#allocation4]
    $region37: #{tpu_custom_call.1} parent=1 // pred_fallthru
      _
    // Predicated region
    $region38: #{tpu_custom_call.1} parent=1 // pred_check
      _
    $region39: #{tpu_custom_call.1} parent=1 // pred_check_branch
      %545 = sbr.rel (0) target = $region41
    $region40: #{tpu_custom_call.1} parent=1 // pred_region
      %546 = dma.done [#allocation4], 128
    $region41: #{tpu_custom_call.1} parent=1 // pred_fallthru
      _
    %547 = vsyncpa [#allocation3], 1
    %548 = vsyncpa [#allocation6], 1
    %549 = vsyncpa [#allocation4], 1

</llo_original>
